<compile_context>
chip_gen: v6e
topology: v6e:2x2x1
jax: 0.10.0
libtpu: 0.0.40
codegen_flags: <defaults>
</compile_context>

<pallas_src>
import jax
import jax.numpy as jnp
from jax.experimental import pallas as pl
from jax.experimental.pallas import tpu as pltpu


def _round_up(x, m):
    return ((x + m - 1) // m) * m


def _physical_vmem_bytes():
    try:
        return int(pltpu.get_tpu_info().vmem_capacity_bytes)
    except Exception:
        return 64 * 1024 * 1024  # most conservative (v7x per-TensorCore)


def _pick_tile_co(c_out):
    # Full extent when small; otherwise the largest MXU-friendly divisor.
    if c_out <= 512:
        return c_out
    for cand in (512, 256, 128, 64, 32, 16, 8):
        if c_out % cand == 0:
            return cand
    return c_out  # full extent is always legal


def _pick_tile_hw(hw, c_in, tile_co, n_co, dtype_bytes, budget, batch):
    hw128 = _round_up(hw, 128)
    w_bufs = 1 if n_co == 1 else 2
    fixed = w_bufs * (tile_co * c_in * dtype_bytes + tile_co * 4)
    per_lane = 2 * (c_in + tile_co) * dtype_bytes  # double-buffered x + out
    max_hw = (budget - fixed) // per_lane
    max_hw = max(128, (max_hw // 128) * 128)
    tile = min(max_hw, hw128)
    tile = max(128, (tile // 128) * 128)
    # Keep >= ~4 parallel grid steps so both v7x TensorCores have work;
    # >=512-lane tiles are still at ~HBM roofline on every generation.
    while tile >= 1024 and batch * (_round_up(hw, tile) // tile) * n_co < 4:
        tile = max(512, ((tile // 2) // 128) * 128)
    return tile


def _make_blockspec(shape, index_map, single_buffer=False):
    if single_buffer:
        try:
            return pl.BlockSpec(shape, index_map, pipeline_mode=pl.Buffered(1))
        except TypeError:  # older pallas without pipeline_mode kwarg
            pass
    return pl.BlockSpec(shape, index_map)


def _make_kernel(c_in, tile_co, tile_hw, use_mxu):
    if use_mxu:
        def kernel(x_ref, w_ref, b_ref, o_ref):
            # x: (C_in, tile_hw), w: (tile_co, C_in), b: (tile_co, 1) f32
            y = jnp.dot(w_ref[...], x_ref[...],
                        preferred_element_type=jnp.float32)
            y = y + b_ref[...]
            o_ref[...] = jnp.maximum(y, 0.0).astype(o_ref.dtype)
    else:
        # Tiny contraction: unrolled VPU broadcast-FMA in f32 instead of a
        # <3%-utilised MXU pass.
        def kernel(x_ref, w_ref, b_ref, o_ref):
            w = w_ref[...].astype(jnp.float32)               # (tile_co, C_in)
            acc = jnp.zeros((tile_co, tile_hw), jnp.float32)
            for c in range(c_in):
                acc = acc + w[:, c:c + 1] * x_ref[c:c + 1, :].astype(jnp.float32)
            acc = acc + b_ref[...]
            o_ref[...] = jnp.maximum(acc, 0.0).astype(o_ref.dtype)
    return kernel


def pointwise_conv(x, weight, bias):
    """y = relu(conv1x1(x)).

    x: (B, C_in, H, W); weight: (C_out, C_in, 1, 1) or (C_out, C_in);
    bias: (C_out,).
    """
    B, C_in, H, W = x.shape
    if weight.ndim == 4:
        weight = weight.reshape(weight.shape[0], weight.shape[1])
    C_out = weight.shape[0]
    HW = H * W
    dtype_bytes = jnp.dtype(x.dtype).itemsize

    # Cast weight to the activation dtype (native bf16 MXU path when x is
    # bf16); accumulate in f32 regardless.  Bias kept in f32.
    w2 = weight.astype(x.dtype)
    b2 = bias.astype(jnp.float32).reshape(C_out, 1)

    phys_vmem = _physical_vmem_bytes()
    budget = int(phys_vmem * 0.45)  # leave headroom for internal scratch

    tile_co = _pick_tile_co(C_out)
    n_co = C_out // tile_co
    tile_hw = _pick_tile_hw(HW, C_in, tile_co, n_co, dtype_bytes, budget, B)

    # Lane-dense view; pad the spatial axis so every tile is a full,
    # unmasked 128-multiple store.
    HW_pad = _round_up(HW, tile_hw)
    x2 = x.reshape(B, C_in, HW)
    if HW_pad != HW:
        x2 = jnp.pad(x2, ((0, 0), (0, 0), (0, HW_pad - HW)))
    n_hw = HW_pad // tile_hw

    use_mxu = C_in > 8
    kernel = _make_kernel(C_in, tile_co, tile_hw, use_mxu)

    # Raise the scoped-VMEM limit when our blocks need it (never above ~90%
    # of physical), otherwise keep a generous 32 MiB floor.
    w_bufs = 1 if n_co == 1 else 2
    est_vmem = (2 * (C_in + tile_co) * tile_hw * dtype_bytes
                + w_bufs * (tile_co * C_in * dtype_bytes + tile_co * 4))
    vmem_limit = int(min(phys_vmem * 0.9,
                         max(2 * est_vmem + (8 << 20), 32 << 20)))

    # C_out axis innermost so the x block index is constant across co steps.
    grid = (B, n_hw, n_co)

    out = pl.pallas_call(
        kernel,
        out_shape=jax.ShapeDtypeStruct((B, C_out, HW_pad), x.dtype),
        grid_spec=pltpu.PrefetchScalarGridSpec(
            num_scalar_prefetch=0,
            grid=grid,
            in_specs=[
                pl.BlockSpec((pl.Squeezed(), C_in, tile_hw),
                             lambda b, t, co: (b, 0, t)),
                _make_blockspec((tile_co, C_in), lambda b, t, co: (co, 0),
                                single_buffer=(n_co == 1)),
                _make_blockspec((tile_co, 1), lambda b, t, co: (co, 0),
                                single_buffer=(n_co == 1)),
            ],
            out_specs=pl.BlockSpec((pl.Squeezed(), tile_co, tile_hw),
                                   lambda b, t, co: (b, co, t)),
        ),
        compiler_params=pltpu.CompilerParams(
            # Every grid step writes a distinct output block: fully parallel.
            dimension_semantics=("parallel", "parallel", "parallel"),
            vmem_limit_bytes=vmem_limit),
    )(x2, w2, b2)

    if HW_pad != HW:
        out = out[:, :, :HW]
    return out.reshape(B, C_out, H, W)


if __name__ == "__main__":
    B, C_in, C_out, H, W = 2, 4, 8, 16, 16

    key = jax.random.PRNGKey(0)
    kx, kw, kb = jax.random.split(key, 3)
    x = jax.random.normal(kx, (B, C_in, H, W), dtype=jnp.float32)
    # PyTorch Conv2d(kernel_size=1) weight/bias shapes.
    weight = jax.random.uniform(kw, (C_out, C_in, 1, 1), jnp.float32,
                                -1.0, 1.0) / jnp.sqrt(C_in)
    bias = jax.random.uniform(kb, (C_out,), jnp.float32, -1.0, 1.0)

    out = jax.block_until_ready(pointwise_conv(x, weight, bias))

    # Pure-JAX reference (same semantics as the PyTorch forward).
    w2d = weight.reshape(C_out, C_in)
    ref = jnp.einsum("oi,bihw->bohw", w2d, x) + bias[None, :, None, None]
    ref = jnp.maximum(ref, 0.0)

    assert out.shape == (B, C_out, H, W) and out.dtype == x.dtype
    assert jnp.allclose(out, ref, atol=1e-5, rtol=1e-5)

    print("KERNEL_OK")
</pallas_src>

<mosaic_0001>
module attributes {stable_mosaic.version = 11 : i64} {
  func.func @kernel(%arg0: i32, %arg1: i32, %arg2: i32, %arg3: memref<1x4x256xf32, #tpu.memory_space<vmem>>, %arg4: memref<8x4xf32, #tpu.memory_space<vmem>>, %arg5: memref<8x1xf32, #tpu.memory_space<vmem>>, %arg6: memref<1x8x256xf32, #tpu.memory_space<vmem>>) attributes {dimension_semantics = [#tpu.dimension_semantics<parallel>, #tpu.dimension_semantics<parallel>, #tpu.dimension_semantics<parallel>], iteration_bounds = array<i64: 2, 1, 1>, scalar_prefetch = 0 : i64, scratch_operands = 0 : i64, tpu.core_type = #tpu.core_type<tc>, window_params = [{transform_indices = @transform_0, window_bounds = array<i64: 1, 4, 256>}, {pipeline_mode = #tpu.pipeline_mode<synchronous>, transform_indices = @transform_1, window_bounds = array<i64: 8, 4>}, {pipeline_mode = #tpu.pipeline_mode<synchronous>, transform_indices = @transform_2, window_bounds = array<i64: 8, 1>}, {transform_indices = @transform_3, window_bounds = array<i64: 1, 8, 256>}]} {
    %c0 = arith.constant 0 : index
    %c0_0 = arith.constant 0 : index
    %0 = vector.load %arg4[%c0, %c0_0] : memref<8x4xf32, #tpu.memory_space<vmem>>, vector<8x4xf32>
    %cst = arith.constant 0.000000e+00 : f32
    %1 = vector.broadcast %cst : f32 to vector<8x256xf32>
    %2 = vector.extract_strided_slice %0 {offsets = [0, 0], sizes = [8, 1], strides = [1, 1]} : vector<8x4xf32> to vector<8x1xf32>
    %c0_1 = arith.constant 0 : index
    %c0_2 = arith.constant 0 : index
    %c0_3 = arith.constant 0 : index
    %3 = vector.load %arg3[%c0_1, %c0_2, %c0_3] : memref<1x4x256xf32, #tpu.memory_space<vmem>>, vector<1x1x256xf32>
    %4 = vector.shape_cast %3 : vector<1x1x256xf32> to vector<1x256xf32>
    %5 = vector.broadcast %2 : vector<8x1xf32> to vector<8x256xf32>
    %6 = vector.broadcast %4 : vector<1x256xf32> to vector<8x256xf32>
    %7 = arith.mulf %5, %6 : vector<8x256xf32>
    %8 = arith.addf %1, %7 : vector<8x256xf32>
    %9 = vector.extract_strided_slice %0 {offsets = [0, 1], sizes = [8, 1], strides = [1, 1]} : vector<8x4xf32> to vector<8x1xf32>
    %c0_4 = arith.constant 0 : index
    %c1 = arith.constant 1 : index
    %c0_5 = arith.constant 0 : index
    %10 = vector.load %arg3[%c0_4, %c1, %c0_5] : memref<1x4x256xf32, #tpu.memory_space<vmem>>, vector<1x1x256xf32>
    %11 = vector.shape_cast %10 : vector<1x1x256xf32> to vector<1x256xf32>
    %12 = vector.broadcast %9 : vector<8x1xf32> to vector<8x256xf32>
    %13 = vector.broadcast %11 : vector<1x256xf32> to vector<8x256xf32>
    %14 = arith.mulf %12, %13 : vector<8x256xf32>
    %15 = arith.addf %8, %14 : vector<8x256xf32>
    %16 = vector.extract_strided_slice %0 {offsets = [0, 2], sizes = [8, 1], strides = [1, 1]} : vector<8x4xf32> to vector<8x1xf32>
    %c0_6 = arith.constant 0 : index
    %c2 = arith.constant 2 : index
    %c0_7 = arith.constant 0 : index
    %17 = vector.load %arg3[%c0_6, %c2, %c0_7] : memref<1x4x256xf32, #tpu.memory_space<vmem>>, vector<1x1x256xf32>
    %18 = vector.shape_cast %17 : vector<1x1x256xf32> to vector<1x256xf32>
    %19 = vector.broadcast %16 : vector<8x1xf32> to vector<8x256xf32>
    %20 = vector.broadcast %18 : vector<1x256xf32> to vector<8x256xf32>
    %21 = arith.mulf %19, %20 : vector<8x256xf32>
    %22 = arith.addf %15, %21 : vector<8x256xf32>
    %23 = vector.extract_strided_slice %0 {offsets = [0, 3], sizes = [8, 1], strides = [1, 1]} : vector<8x4xf32> to vector<8x1xf32>
    %c0_8 = arith.constant 0 : index
    %c3 = arith.constant 3 : index
    %c0_9 = arith.constant 0 : index
    %24 = vector.load %arg3[%c0_8, %c3, %c0_9] : memref<1x4x256xf32, #tpu.memory_space<vmem>>, vector<1x1x256xf32>
    %25 = vector.shape_cast %24 : vector<1x1x256xf32> to vector<1x256xf32>
    %26 = vector.broadcast %23 : vector<8x1xf32> to vector<8x256xf32>
    %27 = vector.broadcast %25 : vector<1x256xf32> to vector<8x256xf32>
    %28 = arith.mulf %26, %27 : vector<8x256xf32>
    %29 = arith.addf %22, %28 : vector<8x256xf32>
    %c0_10 = arith.constant 0 : index
    %c0_11 = arith.constant 0 : index
    %30 = vector.load %arg5[%c0_10, %c0_11] : memref<8x1xf32, #tpu.memory_space<vmem>>, vector<8x1xf32>
    %31 = vector.broadcast %30 : vector<8x1xf32> to vector<8x256xf32>
    %32 = arith.addf %29, %31 : vector<8x256xf32>
    %cst_12 = arith.constant 0.000000e+00 : f32
    %33 = vector.broadcast %cst_12 : f32 to vector<8x256xf32>
    %34 = arith.maximumf %32, %33 : vector<8x256xf32>
    %c0_13 = arith.constant 0 : index
    %c0_14 = arith.constant 0 : index
    %c0_15 = arith.constant 0 : index
    %35 = vector.load %arg6[%c0_13, %c0_14, %c0_15] : memref<1x8x256xf32, #tpu.memory_space<vmem>>, vector<1x8x256xf32>
    %36 = vector.shape_cast %35 : vector<1x8x256xf32> to vector<8x256xf32>
    %37 = vector.shape_cast %34 : vector<8x256xf32> to vector<1x8x256xf32>
    tpu.vector_store %arg6[%c0_13, %c0_14, %c0_15], %37 {strides = array<i32>} : memref<1x8x256xf32, #tpu.memory_space<vmem>>, vector<1x8x256xf32>,
    return
  }
  func.func @transform_0(%arg0: i32, %arg1: i32, %arg2: i32) -> (i32, i32, i32) {
    %c0_i32 = arith.constant 0 : i32
    %c0_i32_0 = arith.constant 0 : i32
    return %arg0, %c0_i32, %arg1 : i32, i32, i32
  }
  func.func @transform_1(%arg0: i32, %arg1: i32, %arg2: i32) -> (i32, i32) {
    %c0_i32 = arith.constant 0 : i32
    %c0_i32_0 = arith.constant 0 : i32
    return %arg2, %c0_i32 : i32, i32
  }
  func.func @transform_2(%arg0: i32, %arg1: i32, %arg2: i32) -> (i32, i32) {
    %c0_i32 = arith.constant 0 : i32
    %c0_i32_0 = arith.constant 0 : i32
    return %arg2, %c0_i32 : i32, i32
  }
  func.func @transform_3(%arg0: i32, %arg1: i32, %arg2: i32) -> (i32, i32, i32) {
    %c0_i32 = arith.constant 0 : i32
    return %arg0, %arg2, %arg1 : i32, i32, i32
  }
}

</mosaic_0001>

<llo_original>
// kernel: tpu_custom_call.1
$region0: #{tpu_custom_call.1}
  #allocation0 [shape = 'u32[]', space=smem, size = 0x4, offset = 0x4, fixed_abs, tag = 'smem constant byte address 0x4 - core index']
  #allocation1 [shape = 'u32[144,128]{1,0:T(1,128)}', space=vmem, size = 0x12000, scoped, tag = 'internal scratch']
  %s0 = inlined_call_operand.vmem [shape: f32[2,4,256], index: 0, kind: input, shape index: {}]
  %s1 = inlined_call_operand.vmem [shape: f32[8,4], index: 1, kind: input, shape index: {}]
  %s2 = inlined_call_operand.vmem [shape: f32[8,1], index: 2, kind: input, shape index: {}]
  %s3 = inlined_call_operand.hbm [shape: f32[2,8,256], index: 3, kind: output, shape index: {}]
  %s4 = sld [smem:[#allocation0]]
  $region45: #{tpu_custom_call.1} parent=0
    _
  %s6 = ssub.s32 1, %s4
  %s7 = scalar_select 0, %s6, %s4
  $region1: #{tpu_custom_call.1} parent=0
    #allocation2 [shape = 'u8[16384]{0}', space=vmem, size = 0x4000, scoped, tag = 'output window, operand 0']
    #allocation3 [shape = 's32[2]{0}', space=sflag, size = 0x8, scoped, tag = 'scoped memory for tpu_custom_call.1']
    %8 = vsyncpa [#allocation3], 0
    %s9 = scalar_lea.sflag [#allocation3], 1
    %10 = vsyncpa %s9, 0
    loop: start=0, step=1, limit=4
    $region2: #{tpu_custom_call.1} parent=1 // loop_pre_header
      _
    $region3: #{tpu_custom_call.1} parent=1 // loop_header
      %s12 = sphi 0, %s16
      %p13 = scmp.ge.s32.totalorder %s12, 4
      %s19 = sphi 0, %s38
      %s20 = sphi 0, %s34
      %s21 = sphi 0, %s30
      %s22 = sphi 0, %s19
      %s23 = sphi 0, %s20
      %s24 = sphi 0, %s21
      %s25 = sphi 0, %s22
      %s26 = sphi 0, %s23
      %s27 = sphi 0, %s24
      %s43 = sphi 0, %s45
      %s46 = sphi 0, %s43
      %s47 = sphi 0, %s46
      %s63 = sphi 0, %s47
      %s69 = sphi 0, %s71
      %s72 = sphi 0, %s69
      %s73 = sphi 0, %s72
      %s89 = sphi 0, %s73
      %s95 = sphi 0, %s97
      %s98 = sphi 0, %s95
      %s99 = sphi 0, %s98
      %s115 = sphi 0, %s99
      %s125 = sphi 0, %s127
      %s128 = sphi 0, %s125
      %s129 = sphi 0, %s128
      %s145 = sphi 0, %s129
    $region4: #{tpu_custom_call.1} parent=1 // loop_header_branch
      %15 = sbr.rel (%p13) target = $region8
    $region5: #{tpu_custom_call.1} parent=1 // loop_body
      %s17 = ssub.s32 %s12, 1
      %s18 = ssub.s32 %s12, 2
      %s28 = sadd.s32 1, %s21
      %p29 = scmp.ge.s32.totalorder %s28, 1
      %s30 = scalar_select %p29, 0, %s28
      %s31 = sadd.s32 1, %s20
      %s32 = scalar_select %p29, %s31, %s20
      %p33 = scmp.ge.s32.totalorder %s32, 1
      %s34 = scalar_select %p33, 0, %s32
      %s35 = sadd.s32 1, %s19
      %s36 = scalar_select %p33, %s35, %s19
      %p37 = scmp.ge.s32.totalorder %s36, 2
      %s38 = scalar_select %p37, 0, %s36
      %s39 = ssub.s32 %s19, %s38
      %s40 = ssub.s32 %s20, %s34
      %s41 = sor.u32 %s39, %s40
      %p42 = scmp.eq.s32.totalorder %s41, 0
      %s44 = sadd.s32 %s43, 1
      %s45 = scalar_select %p42, %s43, %s44
      %p48 = pneg %p42
      %p49 = scmp.eq.s32.totalorder %s12, 1
      %p50 = por %p48, %p49
      %p51 = scmp.ne.s32.totalorder %s43, %s46
      %p52 = scmp.eq.s32.totalorder %s12, 0
      %p53 = por %p51, %p52
      %p54 = scmp.ne.s32.totalorder %s43, %s46
      %p55 = scmp.eq.s32.totalorder %s17, 1
      %p56 = por %p54, %p55
      %p57 = scmp.ne.s32.totalorder %s46, %s47
      %p58 = scmp.eq.s32.totalorder %s17, 0
      %p59 = por %p57, %p58
      %p60 = scmp.ne.s32.totalorder %s46, %s47
      %p61 = scmp.eq.s32.totalorder %s18, 1
      %p62 = por %p60, %p61
      %p64 = scmp.ne.s32.totalorder %s47, %s63
      %p65 = scmp.eq.s32.totalorder %s18, 0
      %p66 = por %p64, %p65
      %s67 = ssub.s32 %s21, %s30
      %p68 = scmp.eq.s32.totalorder %s67, 0
      %s70 = sadd.s32 %s69, 1
      %s71 = scalar_select %p68, %s69, %s70
      %p74 = pneg %p68
      %p75 = scmp.eq.s32.totalorder %s12, 1
      %p76 = por %p74, %p75
      %p77 = scmp.ne.s32.totalorder %s69, %s72
      %p78 = scmp.eq.s32.totalorder %s12, 0
      %p79 = por %p77, %p78
      %p80 = scmp.ne.s32.totalorder %s69, %s72
      %p81 = scmp.eq.s32.totalorder %s17, 1
      %p82 = por %p80, %p81
      %p83 = scmp.ne.s32.totalorder %s72, %s73
      %p84 = scmp.eq.s32.totalorder %s17, 0
      %p85 = por %p83, %p84
      %p86 = scmp.ne.s32.totalorder %s72, %s73
      %p87 = scmp.eq.s32.totalorder %s18, 1
      %p88 = por %p86, %p87
      %p90 = scmp.ne.s32.totalorder %s73, %s89
      %p91 = scmp.eq.s32.totalorder %s18, 0
      %p92 = por %p90, %p91
      %s93 = ssub.s32 %s21, %s30
      %p94 = scmp.eq.s32.totalorder %s93, 0
      %s96 = sadd.s32 %s95, 1
      %s97 = scalar_select %p94, %s95, %s96
      %p100 = pneg %p94
      %p101 = scmp.eq.s32.totalorder %s12, 1
      %p102 = por %p100, %p101
      %p103 = scmp.ne.s32.totalorder %s95, %s98
      %p104 = scmp.eq.s32.totalorder %s12, 0
      %p105 = por %p103, %p104
      %p106 = scmp.ne.s32.totalorder %s95, %s98
      %p107 = scmp.eq.s32.totalorder %s17, 1
      %p108 = por %p106, %p107
      %p109 = scmp.ne.s32.totalorder %s98, %s99
      %p110 = scmp.eq.s32.totalorder %s17, 0
      %p111 = por %p109, %p110
      %p112 = scmp.ne.s32.totalorder %s98, %s99
      %p113 = scmp.eq.s32.totalorder %s18, 1
      %p114 = por %p112, %p113
      %p116 = scmp.ne.s32.totalorder %s99, %s115
      %p117 = scmp.eq.s32.totalorder %s18, 0
      %p118 = por %p116, %p117
      %s119 = ssub.s32 %s19, %s38
      %s120 = ssub.s32 %s21, %s30
      %s121 = sor.u32 %s119, %s120
      %s122 = ssub.s32 %s20, %s34
      %s123 = sor.u32 %s121, %s122
      %p124 = scmp.eq.s32.totalorder %s123, 0
      %s126 = sadd.s32 %s125, 1
      %s127 = scalar_select %p124, %s125, %s126
      %p130 = pneg %p124
      %p131 = scmp.eq.s32.totalorder %s12, 1
      %p132 = por %p130, %p131
      %p133 = scmp.ne.s32.totalorder %s125, %s128
      %p134 = scmp.eq.s32.totalorder %s12, 0
      %p135 = por %p133, %p134
      %p136 = scmp.ne.s32.totalorder %s125, %s128
      %p137 = scmp.eq.s32.totalorder %s17, 1
      %p138 = por %p136, %p137
      %p139 = scmp.ne.s32.totalorder %s128, %s129
      %p140 = scmp.eq.s32.totalorder %s17, 0
      %p141 = por %p139, %p140
      %p142 = scmp.ne.s32.totalorder %s128, %s129
      %p143 = scmp.eq.s32.totalorder %s18, 1
      %p144 = por %p142, %p143
      %p146 = scmp.ne.s32.totalorder %s129, %s145
      %p147 = scmp.eq.s32.totalorder %s18, 0
      %p148 = por %p146, %p147
      %p149 = scmp.le.s32.totalorder 1, %s12
      %p150 = scmp.lt.s32.totalorder %s12, 3
      %p151 = pnand %p149, %p150
      %p152 = pneg %p151
      // Predicated region
      $region9: #{tpu_custom_call.1} parent=5 // pred_check
        _
      $region10: #{tpu_custom_call.1} parent=5 // pred_check_branch
        %154 = sbr.rel (%p151) target = $region12
      $region11: #{tpu_custom_call.1} parent=5 // pred_region
        %s155 = ssub.s32 %s12, 1
        // Predicated region
        $region13: #{tpu_custom_call.1} parent=11 // pred_check
          %p156 = pneg %p85
        $region14: #{tpu_custom_call.1} parent=11 // pred_check_branch
          %158 = sbr.rel (%p156) target = $region16
        $region15: #{tpu_custom_call.1} parent=11 // pred_region
          %p159 = scmp.lt.s32.totalorder %s24, 0
          %s160 = scalar_select %p159, %s24, 0
          %s161 = smul.addr %s160, 8
          %s162 = scalar_lea.vmem %s1, %s161
        $region16: #{tpu_custom_call.1} parent=11 // pred_fallthru
          _
        // Predicated region
        $region17: #{tpu_custom_call.1} parent=11 // pred_check
          %p163 = pneg %p111
        $region18: #{tpu_custom_call.1} parent=11 // pred_check_branch
          %165 = sbr.rel (%p163) target = $region20
        $region19: #{tpu_custom_call.1} parent=11 // pred_region
          %p166 = scmp.lt.s32.totalorder %s24, 0
          %s167 = scalar_select %p166, %s24, 0
          %s168 = smul.addr %s167, 8
          %s169 = scalar_lea.vmem %s2, %s168
        $region20: #{tpu_custom_call.1} parent=11 // pred_fallthru
          _
      $region12: #{tpu_custom_call.1} parent=5 // pred_fallthru
        _
      %p170 = scmp.lt.s32.totalorder %s12, 2
      // Predicated region
      $region21: #{tpu_custom_call.1} parent=5 // pred_check
        %p171 = pneg %p170
      $region22: #{tpu_custom_call.1} parent=5 // pred_check_branch
        %173 = sbr.rel (%p171) target = $region24
      $region23: #{tpu_custom_call.1} parent=5 // pred_region
        // Predicated region
        $region25: #{tpu_custom_call.1} parent=23 // pred_check
          %p174 = pneg %p53
        $region26: #{tpu_custom_call.1} parent=23 // pred_check_branch
          %176 = sbr.rel (%p174) target = $region28
        $region27: #{tpu_custom_call.1} parent=23 // pred_region
          %s177 = smul.u32 2, %s20
          %p178 = scmp.lt.s32.totalorder %s19, 1
          %s179 = scalar_select %p178, %s19, 1
          %p180 = scmp.lt.s32.totalorder %s177, 1
          %s181 = scalar_select %p180, %s177, 1
          %s182 = smul.addr %s179, 2
          %s183 = sadd.s32 %s181, %s182
          %s184 = smul.addr %s183, 4
          %s185 = scalar_lea.vmem %s0, %s184
          %s186 = smul.u32 2, %s20
        $region28: #{tpu_custom_call.1} parent=23 // pred_fallthru
          _
      $region24: #{tpu_custom_call.1} parent=5 // pred_fallthru
        _
      %p187 = scmp.le.s32.totalorder 1, %s12
      %p188 = scmp.lt.s32.totalorder %s12, 3
      %p189 = pnand %p187, %p188
      %p190 = pneg %p189
      // Predicated region
      $region29: #{tpu_custom_call.1} parent=5 // pred_check
        _
      $region30: #{tpu_custom_call.1} parent=5 // pred_check_branch
        %192 = sbr.rel (%p189) target = $region32
      $region31: #{tpu_custom_call.1} parent=5 // pred_region
        %s193 = ssub.s32 %s12, 1
        %s194 = smul.u32 2, %s23
        %p195 = scmp.lt.s32.totalorder %s22, 1
        %s196 = scalar_select %p195, %s22, 1
        %p197 = scmp.lt.s32.totalorder %s194, 1
        %s198 = scalar_select %p197, %s194, 1
        %s199 = smul.addr %s196, 2
        %s200 = sadd.s32 %s198, %s199
        %s201 = smul.addr %s200, 4
        %s202 = scalar_lea.vmem %s0, %s201
        %p203 = pneg %p59
        %p204 = pneg %p56
        %p205 = scmp.lt.s32.totalorder %s24, 0
        %s206 = scalar_select %p205, %s24, 0
        %s207 = smul.addr %s206, 8
        %s208 = scalar_lea.vmem %s1, %s207
        %p209 = pneg %p85
        %p210 = pneg %p82
        %p211 = scmp.lt.s32.totalorder %s24, 0
        %s212 = scalar_select %p211, %s24, 0
        %s213 = smul.addr %s212, 8
        %s214 = scalar_lea.vmem %s2, %s213
        %p215 = pneg %p111
        %p216 = pneg %p108
        %p217 = pneg %p141
        %p218 = pneg %p138
        %s219 = sand.u32 %s128, 1
        %s220 = scalar_lea.sflag [#allocation3], %s219
        %s221 = sand.u32 %s128, 1
        %s222 = smul.addr %s221, 16
        %s223 = scalar_lea.vmem [#allocation2], %s222
        %s224 = smul.u32 2, %s23
        %p225 = scmp.lt.s32.totalorder %s22, 1
        %s226 = scalar_select %p225, %s22, 1
        %p227 = scmp.lt.s32.totalorder %s224, 1
        %s228 = scalar_select %p227, %s224, 1
        %s229 = smul.addr %s226, 2
        %s230 = sadd.s32 %s228, %s229
        %s231 = smul.addr %s230, 4
        %s232 = scalar_lea.vmem %s0, %s231
        %s233 = smul.u32 2, %s23
        %p234 = scmp.lt.s32.totalorder %s24, 0
        %s235 = scalar_select %p234, %s24, 0
        %s236 = smul.addr %s235, 8
        %s237 = scalar_lea.vmem %s1, %s236
        %p238 = scmp.lt.s32.totalorder %s24, 0
        %s239 = scalar_select %p238, %s24, 0
        %s240 = smul.addr %s239, 8
        %s241 = scalar_lea.vmem %s2, %s240
        %s242 = smul.u32 2, %s23
        %v243 = vld [vmem:[%s237] sm:$0xff]
        %v244 = vld [vmem:[%s232] ss:$4 sm:$0x3]
        %246 = vset.pattern.permute.xlu0 0
        %247 = vperm.xlu0 %246, %v243
        %v248 = vpop.permute.xlu0 %247
        %v251 = vlaneseq
        %v252 = vshrl.u32 %v251, 7
        %v253 = vsub.s32 0, %v252
        %v254 = vrot.slane %v244, %v253
        %v255 = vlaneseq
        %v256 = vshrl.u32 %v255, 7
        %v257 = vsub.s32 1, %v256
        %v258 = vrot.slane %v244, %v257
        %v261 = vmul.f32 %v248, %v254
        %v262 = vmul.f32 %v248, %v258
        %v263 = vadd.f32 %v261, 0.0
        %v264 = vadd.f32 %v262, 0.0
        %s265 = scalar_lea.vmem %s232, 1
        %v266 = vld [vmem:[%s265] ss:$4 sm:$0x3]
        %267 = vset.pattern.permute.xlu0 1
        %268 = vperm.xlu0 %267, %v243
        %v269 = vpop.permute.xlu0 %268
        %v272 = vlaneseq
        %v273 = vshrl.u32 %v272, 7
        %v274 = vsub.s32 0, %v273
        %v275 = vrot.slane %v266, %v274
        %v276 = vlaneseq
        %v277 = vshrl.u32 %v276, 7
        %v278 = vsub.s32 1, %v277
        %v279 = vrot.slane %v266, %v278
        %v282 = vmul.f32 %v269, %v275
        %v283 = vmul.f32 %v269, %v279
        %v284 = vadd.f32 %v263, %v282
        %v285 = vadd.f32 %v264, %v283
        %s286 = scalar_lea.vmem %s232, 2
        %v287 = vld [vmem:[%s286] ss:$4 sm:$0x3]
        %288 = vset.pattern.permute.xlu0 2
        %289 = vperm.xlu0 %288, %v243
        %v290 = vpop.permute.xlu0 %289
        %v293 = vlaneseq
        %v294 = vshrl.u32 %v293, 7
        %v295 = vsub.s32 0, %v294
        %v296 = vrot.slane %v287, %v295
        %v297 = vlaneseq
        %v298 = vshrl.u32 %v297, 7
        %v299 = vsub.s32 1, %v298
        %v300 = vrot.slane %v287, %v299
        %v303 = vmul.f32 %v290, %v296
        %v304 = vmul.f32 %v290, %v300
        %v305 = vadd.f32 %v284, %v303
        %v306 = vadd.f32 %v285, %v304
        %s307 = scalar_lea.vmem %s232, 3
        %v308 = vld [vmem:[%s307] ss:$4 sm:$0x3]
        %309 = vset.pattern.permute.xlu0 3
        %310 = vperm.xlu0 %309, %v243
        %v311 = vpop.permute.xlu0 %310
        %v314 = vlaneseq
        %v315 = vshrl.u32 %v314, 7
        %v316 = vsub.s32 0, %v315
        %v317 = vrot.slane %v308, %v316
        %v318 = vlaneseq
        %v319 = vshrl.u32 %v318, 7
        %v320 = vsub.s32 1, %v319
        %v321 = vrot.slane %v308, %v320
        %v324 = vmul.f32 %v311, %v317
        %v325 = vmul.f32 %v311, %v321
        %v326 = vadd.f32 %v305, %v324
        %v327 = vadd.f32 %v306, %v325
        %v328 = vld [vmem:[%s241] sm:$0xff]
        %330 = vset.pattern.permute.xlu0 0
        %331 = vperm.xlu0 %330, %v328
        %v332 = vpop.permute.xlu0 %331
        %v334 = vadd.f32 %v326, %v332
        %v335 = vadd.f32 %v327, %v332
        %v336 = vmax.f32 %v334, 0.0
        %v337 = vmax.f32 %v335, 0.0
        %338 = vst [vmem:[%s223] sm:$0xff] %v336
        %339 = vst [vmem:[%s223 + $0x8] sm:$0xff] %v337
        %s340 = sand.u32 %s128, 1
        %s341 = scalar_lea.sflag [#allocation3], %s340
        %s342 = sand.u32 %s128, 1
        %s343 = smul.addr %s342, 16
        %s344 = scalar_lea.vmem [#allocation2], %s343
        // Predicated region
        $region33: #{tpu_custom_call.1} parent=31 // pred_check
          %p345 = pneg %p138
        $region34: #{tpu_custom_call.1} parent=31 // pred_check_branch
          %347 = sbr.rel (%p345) target = $region36
        $region35: #{tpu_custom_call.1} parent=31 // pred_region
          %s348 = smul.u32 2, %s23
          %s350 = ssub.s32 256, 256
          %351 = vsyncadd %s341, %s350
          %s352 = smul.addr %s24, 2
          %s353 = sadd.s32 %s348, %s352
          %s354 = smul.addr %s22, 2
          %s355 = sadd.s32 %s353, %s354
          %s356 = smul.addr %s355, 128
          %s357 = scalar_lea.hbm %s3, %s356
          %s359 = sshll.u32 %s344, 4
          %s360 = int_to_ptr.vmem [resolvable:$true] %s359
          %362 = dma.vmem_to_hbm [thread:$0]  %s360, 256, %s357, %s341
        $region36: #{tpu_custom_call.1} parent=31 // pred_fallthru
          _
      $region32: #{tpu_custom_call.1} parent=5 // pred_fallthru
        _
      %p363 = scmp.le.s32.totalorder 2, %s12
      // Predicated region
      $region37: #{tpu_custom_call.1} parent=5 // pred_check
        %p364 = pneg %p363
      $region38: #{tpu_custom_call.1} parent=5 // pred_check_branch
        %366 = sbr.rel (%p364) target = $region40
      $region39: #{tpu_custom_call.1} parent=5 // pred_region
        %s367 = ssub.s32 %s12, 2
        // Predicated region
        $region41: #{tpu_custom_call.1} parent=39 // pred_check
          %p368 = pneg %p144
        $region42: #{tpu_custom_call.1} parent=39 // pred_check_branch
          %370 = sbr.rel (%p368) target = $region44
        $region43: #{tpu_custom_call.1} parent=39 // pred_region
          %s371 = sand.u32 %s129, 1
          %s372 = scalar_lea.sflag [#allocation3], %s371
          %s373 = sand.u32 %s129, 1
          %s374 = smul.addr %s373, 16
          %s375 = scalar_lea.vmem [#allocation2], %s374
          %376 = dma.done %s372, 256
        $region44: #{tpu_custom_call.1} parent=39 // pred_fallthru
          _
      $region40: #{tpu_custom_call.1} parent=5 // pred_fallthru
        _
    $region6: #{tpu_custom_call.1} parent=1 // loop_footer
      %s16 = sadd.s32 1, %s12
    $region7: #{tpu_custom_call.1} parent=1 // loop_footer_branch
      %11 = sbr.rel target = $region3
    $region8: #{tpu_custom_call.1} parent=1 // loop_exit
      _
    %377 = vsyncpa [#allocation3], 1
    %s378 = scalar_lea.sflag [#allocation3], 1
    %379 = vsyncpa %s378, 1

</llo_original>
